<compile_context>
chip_gen: v6e
topology: v6e:2x2x1
jax: 0.10.0
libtpu: 0.0.40
codegen_flags: <defaults>
</compile_context>

<pallas_src>
import functools

import jax
import jax.numpy as jnp
from jax.experimental import pallas as pl
from jax.experimental.pallas import tpu as pltpu

LANE = 128
MAX_TB = 2048   # batch-tile cap; ~3.5 MiB/step incl. double buffers, safe on v5e/v6e/v7x


def _round_up(n, m):
    return ((n + m - 1) // m) * m


def _cdiv(a, b):
    return -(-a // b)


def mlp_kernel(x_ref, w1_ref, b1_ref, w2_ref, b2_ref, w3_ref, b3_ref, o_ref):
    # fc1 + relu  (bf16 MXU matmul, f32 accumulate, f32 bias/ReLU on the VPU)
    x = x_ref[...].astype(jnp.bfloat16)
    h1 = jnp.dot(x, w1_ref[...], preferred_element_type=jnp.float32)
    h1 = jnp.maximum(h1 + b1_ref[...], 0.0)
    # fc2 + relu
    h2 = jnp.dot(h1.astype(jnp.bfloat16), w2_ref[...],
                 preferred_element_type=jnp.float32)
    h2 = jnp.maximum(h2 + b2_ref[...], 0.0)
    # fc3 (logits, lane-padded to 128, no activation); bf16 store halves writeback
    out = jnp.dot(h2.astype(jnp.bfloat16), w3_ref[...],
                  preferred_element_type=jnp.float32)
    o_ref[...] = (out + b3_ref[...]).astype(o_ref.dtype)


def _choose_tiling(B, tb):
    """Pick (tb, B_pad). 16-row alignment for bf16 output sublane packing."""
    B_al = _round_up(B, 16)
    if tb is not None:
        tb = _round_up(tb, 16)
        return tb, _round_up(B_al, tb)
    if B_al <= MAX_TB:
        # Tiny/medium batch: one grid step (also avoids a 2/1 core split on v7x).
        return B_al, B_al
    steps = _cdiv(B_al, MAX_TB)
    if steps % 2:            # v7x megacore: keep the step count even
        steps += 1
    tb = _round_up(_cdiv(B_al, steps), 16)
    return tb, steps * tb


def neural_net_forward(x, w1, b1, w2, b2, w3, b3, *, tb=None):
    """Pallas-fused forward pass matching PyTorch NeuralNet.forward.

    x:  (B, input_dim) float32
    w1: (input_dim, H1), b1: (1, H1)
    w2: (H1, H2),        b2: (1, H2)
    w3: (H2, C),         b3: (1, C)
    returns logits (B, C) float32
    """
    B, in_dim = x.shape
    H1 = w1.shape[1]
    H2 = w2.shape[1]
    C = w3.shape[1]

    # --- lane-pad hidden/output dims to multiples of 128 (zero fill) ---------
    H1p = _round_up(H1, LANE)
    H2p = _round_up(H2, LANE)
    Cp = _round_up(C, LANE)

    w1p = jnp.zeros((in_dim, H1p), jnp.bfloat16).at[:, :H1].set(w1.astype(jnp.bfloat16))
    b1p = jnp.zeros((1, H1p), jnp.float32).at[:, :H1].set(b1.astype(jnp.float32))
    w2p = jnp.zeros((H1p, H2p), jnp.bfloat16).at[:H1, :H2].set(w2.astype(jnp.bfloat16))
    b2p = jnp.zeros((1, H2p), jnp.float32).at[:, :H2].set(b2.astype(jnp.float32))
    w3p = jnp.zeros((H2p, Cp), jnp.bfloat16).at[:H2, :C].set(w3.astype(jnp.bfloat16))
    b3p = jnp.zeros((1, Cp), jnp.float32).at[:, :C].set(b3.astype(jnp.float32))

    # --- batch tiling (no wrapper-side dtype cast of x; only tiny row pad) ---
    tb, B_pad = _choose_tiling(B, tb)
    xb = x
    if B_pad != B:
        xb = jnp.pad(xb, ((0, B_pad - B), (0, 0)))
    grid = (B_pad // tb,)

    # Weights/biases: full-array blocks with constant index_map -> VMEM resident.
    const = lambda i: (0, 0)
    in_specs = [
        pl.BlockSpec((tb, in_dim), lambda i: (i, 0)),   # x tile streams
        pl.BlockSpec((in_dim, H1p), const),
        pl.BlockSpec((1, H1p), const),
        pl.BlockSpec((H1p, H2p), const),
        pl.BlockSpec((1, H2p), const),
        pl.BlockSpec((H2p, Cp), const),
        pl.BlockSpec((1, Cp), const),
    ]
    out_spec = pl.BlockSpec((tb, Cp), lambda i: (i, 0))

    flops = 2 * B_pad * (in_dim * H1p + H1p * H2p + H2p * Cp)
    bytes_accessed = (
        B_pad * in_dim * 4                              # x (f32 in)
        + (in_dim * H1p + H1p * H2p + H2p * Cp) * 2     # weights (bf16)
        + (H1p + H2p + Cp) * 4                          # biases (f32)
        + B_pad * Cp * 2                                # logits out (bf16)
    )

    out_pad = pl.pallas_call(
        mlp_kernel,
        out_shape=jax.ShapeDtypeStruct((B_pad, Cp), jnp.bfloat16),
        grid=grid,
        in_specs=in_specs,
        out_specs=out_spec,
        compiler_params=pltpu.CompilerParams(
            dimension_semantics=("parallel",),
        ),
        cost_estimate=pl.CostEstimate(
            flops=flops, transcendentals=0, bytes_accessed=bytes_accessed),
    )(xb, w1p, b1p, w2p, b2p, w3p, b3p)

    # Slice away batch/lane padding and restore f32 (fuses under jit).
    return out_pad[:B, :C].astype(jnp.float32)


def ref_forward(x, w1, b1, w2, b2, w3, b3):
    """Pure-JAX reference mirroring the kernel's exact numerics
    (bf16 MXU inputs, f32 accumulation/bias/ReLU, bf16 logits store)."""
    bf = lambda a: a.astype(jnp.bfloat16)
    h1 = jnp.maximum(jnp.dot(bf(x), bf(w1), preferred_element_type=jnp.float32) + b1, 0.0)
    h2 = jnp.maximum(jnp.dot(bf(h1), bf(w2), preferred_element_type=jnp.float32) + b2, 0.0)
    out = jnp.dot(bf(h2), bf(w3), preferred_element_type=jnp.float32) + b3
    return out.astype(jnp.bfloat16).astype(jnp.float32)


def init_params(key, input_dim, hidden_dim1, hidden_dim2, output_dim):
    """Deterministic synthetic parameter init (Kaiming-uniform-like bounds)."""
    ks = jax.random.split(key, 6)

    def lin(kw, kb, fan_in, fan_out):
        bound = 1.0 / jnp.sqrt(fan_in)
        # stored as (in, out) so kernel computes x @ W + b  (== x @ W_pt.T + b)
        w = jax.random.uniform(kw, (fan_in, fan_out), jnp.float32, -bound, bound)
        b = jax.random.uniform(kb, (1, fan_out), jnp.float32, -bound, bound)
        return w, b

    w1, b1 = lin(ks[0], ks[1], input_dim, hidden_dim1)
    w2, b2 = lin(ks[2], ks[3], hidden_dim1, hidden_dim2)
    w3, b3 = lin(ks[4], ks[5], hidden_dim2, output_dim)
    return w1, b1, w2, b2, w3, b3


if __name__ == "__main__":
    # Small shapes consistent with the module: tabular features -> n_classes.
    batch = 72          # not a tile multiple -> exercises the 16-row padding path
    input_dim = 16      # feature columns after dropping the target
    hidden_dim1 = 64
    hidden_dim2 = 32
    n_classes = 4       # data[target_col].nunique() stand-in

    key = jax.random.PRNGKey(0)
    kx, kx2, kp = jax.random.split(key, 3)
    x = jax.random.normal(kx, (batch, input_dim), dtype=jnp.float32)
    params = init_params(kp, input_dim, hidden_dim1, hidden_dim2, n_classes)

    # 1) Default tiling: tiny batch collapses to a single grid step (tb=80).
    fwd = jax.jit(neural_net_forward)
    logits = jax.block_until_ready(fwd(x, *params))
    ref = ref_forward(x, *params)
    assert logits.shape == (batch, n_classes)
    assert jnp.allclose(logits, ref, atol=2e-3, rtol=2e-3), (
        float(jnp.max(jnp.abs(logits - ref))))

    # 2) Explicit small tile: exercises the multi-step pipelined grid path.
    batch2 = 200
    x2 = jax.random.normal(kx2, (batch2, input_dim), dtype=jnp.float32)
    fwd2 = jax.jit(functools.partial(neural_net_forward, tb=64))
    logits2 = jax.block_until_ready(fwd2(x2, *params))
    ref2 = ref_forward(x2, *params)
    assert logits2.shape == (batch2, n_classes)
    assert jnp.allclose(logits2, ref2, atol=2e-3, rtol=2e-3), (
        float(jnp.max(jnp.abs(logits2 - ref2))))

    print("KERNEL_OK")
</pallas_src>

<mosaic_0001>
module attributes {stable_mosaic.version = 11 : i64} {
  func.func @mlp_kernel(%arg0: i32, %arg1: memref<80x16xf32, #tpu.memory_space<vmem>>, %arg2: memref<16x128xbf16, #tpu.memory_space<vmem>>, %arg3: memref<1x128xf32, #tpu.memory_space<vmem>>, %arg4: memref<128x128xbf16, #tpu.memory_space<vmem>>, %arg5: memref<1x128xf32, #tpu.memory_space<vmem>>, %arg6: memref<128x128xbf16, #tpu.memory_space<vmem>>, %arg7: memref<1x128xf32, #tpu.memory_space<vmem>>, %arg8: memref<80x128xbf16, #tpu.memory_space<vmem>>) attributes {dimension_semantics = [#tpu.dimension_semantics<parallel>], iteration_bounds = array<i64: 1>, scalar_prefetch = 0 : i64, scratch_operands = 0 : i64, tpu.core_type = #tpu.core_type<tc>, window_params = [{transform_indices = @transform_0, window_bounds = array<i64: 80, 16>}, {pipeline_mode = #tpu.pipeline_mode<synchronous>, transform_indices = @transform_1, window_bounds = array<i64: 16, 128>}, {pipeline_mode = #tpu.pipeline_mode<synchronous>, transform_indices = @transform_2, window_bounds = array<i64: 1, 128>}, {pipeline_mode = #tpu.pipeline_mode<synchronous>, transform_indices = @transform_3, window_bounds = array<i64: 128, 128>}, {pipeline_mode = #tpu.pipeline_mode<synchronous>, transform_indices = @transform_4, window_bounds = array<i64: 1, 128>}, {pipeline_mode = #tpu.pipeline_mode<synchronous>, transform_indices = @transform_5, window_bounds = array<i64: 128, 128>}, {pipeline_mode = #tpu.pipeline_mode<synchronous>, transform_indices = @transform_6, window_bounds = array<i64: 1, 128>}, {transform_indices = @transform_7, window_bounds = array<i64: 80, 128>}]} {
    %c0 = arith.constant 0 : index
    %c0_0 = arith.constant 0 : index
    %0 = vector.load %arg1[%c0, %c0_0] : memref<80x16xf32, #tpu.memory_space<vmem>>, vector<80x16xf32>
    %1 = arith.truncf %0 : vector<80x16xf32> to vector<80x16xbf16>
    %c0_1 = arith.constant 0 : index
    %c0_2 = arith.constant 0 : index
    %2 = vector.load %arg2[%c0_1, %c0_2] : memref<16x128xbf16, #tpu.memory_space<vmem>>, vector<16x128xbf16>
    %cst = arith.constant dense<0.000000e+00> : vector<80x128xf32>
    %3 = tpu.matmul %1, %2, %cst {dimension_numbers = #tpu.dot_dimension_numbers<[1], [0], [0], [1], [0, 0, 1, 1], [], []>} : vector<80x16xbf16>, vector<16x128xbf16>, vector<80x128xf32> -> vector<80x128xf32>
    %c0_3 = arith.constant 0 : index
    %c0_4 = arith.constant 0 : index
    %4 = vector.load %arg3[%c0_3, %c0_4] : memref<1x128xf32, #tpu.memory_space<vmem>>, vector<1x128xf32>
    %5 = vector.broadcast %4 : vector<1x128xf32> to vector<80x128xf32>
    %6 = arith.addf %3, %5 : vector<80x128xf32>
    %cst_5 = arith.constant 0.000000e+00 : f32
    %7 = vector.broadcast %cst_5 : f32 to vector<80x128xf32>
    %8 = arith.maximumf %6, %7 : vector<80x128xf32>
    %9 = arith.truncf %8 : vector<80x128xf32> to vector<80x128xbf16>
    %c0_6 = arith.constant 0 : index
    %c0_7 = arith.constant 0 : index
    %10 = vector.load %arg4[%c0_6, %c0_7] : memref<128x128xbf16, #tpu.memory_space<vmem>>, vector<128x128xbf16>
    %cst_8 = arith.constant dense<0.000000e+00> : vector<80x128xf32>
    %11 = tpu.matmul %9, %10, %cst_8 {dimension_numbers = #tpu.dot_dimension_numbers<[1], [0], [0], [1], [0, 0, 1, 1], [], []>} : vector<80x128xbf16>, vector<128x128xbf16>, vector<80x128xf32> -> vector<80x128xf32>
    %c0_9 = arith.constant 0 : index
    %c0_10 = arith.constant 0 : index
    %12 = vector.load %arg5[%c0_9, %c0_10] : memref<1x128xf32, #tpu.memory_space<vmem>>, vector<1x128xf32>
    %13 = vector.broadcast %12 : vector<1x128xf32> to vector<80x128xf32>
    %14 = arith.addf %11, %13 : vector<80x128xf32>
    %cst_11 = arith.constant 0.000000e+00 : f32
    %15 = vector.broadcast %cst_11 : f32 to vector<80x128xf32>
    %16 = arith.maximumf %14, %15 : vector<80x128xf32>
    %17 = arith.truncf %16 : vector<80x128xf32> to vector<80x128xbf16>
    %c0_12 = arith.constant 0 : index
    %c0_13 = arith.constant 0 : index
    %18 = vector.load %arg6[%c0_12, %c0_13] : memref<128x128xbf16, #tpu.memory_space<vmem>>, vector<128x128xbf16>
    %cst_14 = arith.constant dense<0.000000e+00> : vector<80x128xf32>
    %19 = tpu.matmul %17, %18, %cst_14 {dimension_numbers = #tpu.dot_dimension_numbers<[1], [0], [0], [1], [0, 0, 1, 1], [], []>} : vector<80x128xbf16>, vector<128x128xbf16>, vector<80x128xf32> -> vector<80x128xf32>
    %c0_15 = arith.constant 0 : index
    %c0_16 = arith.constant 0 : index
    %20 = vector.load %arg7[%c0_15, %c0_16] : memref<1x128xf32, #tpu.memory_space<vmem>>, vector<1x128xf32>
    %21 = vector.broadcast %20 : vector<1x128xf32> to vector<80x128xf32>
    %22 = arith.addf %19, %21 : vector<80x128xf32>
    %23 = arith.truncf %22 : vector<80x128xf32> to vector<80x128xbf16>
    %c0_17 = arith.constant 0 : index
    %c0_18 = arith.constant 0 : index
    %24 = vector.load %arg8[%c0_17, %c0_18] : memref<80x128xbf16, #tpu.memory_space<vmem>>, vector<80x128xbf16>
    tpu.vector_store %arg8[%c0_17, %c0_18], %23 {strides = array<i32>} : memref<80x128xbf16, #tpu.memory_space<vmem>>, vector<80x128xbf16>,
    return
  }
  func.func @transform_0(%arg0: i32) -> (i32, i32) {
    %c0_i32 = arith.constant 0 : i32
    %c0_i32_0 = arith.constant 0 : i32
    return %arg0, %c0_i32 : i32, i32
  }
  func.func @transform_1(%arg0: i32) -> (i32, i32) {
    %c0_i32 = arith.constant 0 : i32
    %c0_i32_0 = arith.constant 0 : i32
    %c0_i32_1 = arith.constant 0 : i32
    return %c0_i32, %c0_i32_0 : i32, i32
  }
  func.func @transform_2(%arg0: i32) -> (i32, i32) {
    %c0_i32 = arith.constant 0 : i32
    %c0_i32_0 = arith.constant 0 : i32
    %c0_i32_1 = arith.constant 0 : i32
    return %c0_i32, %c0_i32_0 : i32, i32
  }
  func.func @transform_3(%arg0: i32) -> (i32, i32) {
    %c0_i32 = arith.constant 0 : i32
    %c0_i32_0 = arith.constant 0 : i32
    %c0_i32_1 = arith.constant 0 : i32
    return %c0_i32, %c0_i32_0 : i32, i32
  }
  func.func @transform_4(%arg0: i32) -> (i32, i32) {
    %c0_i32 = arith.constant 0 : i32
    %c0_i32_0 = arith.constant 0 : i32
    %c0_i32_1 = arith.constant 0 : i32
    return %c0_i32, %c0_i32_0 : i32, i32
  }
  func.func @transform_5(%arg0: i32) -> (i32, i32) {
    %c0_i32 = arith.constant 0 : i32
    %c0_i32_0 = arith.constant 0 : i32
    %c0_i32_1 = arith.constant 0 : i32
    return %c0_i32, %c0_i32_0 : i32, i32
  }
  func.func @transform_6(%arg0: i32) -> (i32, i32) {
    %c0_i32 = arith.constant 0 : i32
    %c0_i32_0 = arith.constant 0 : i32
    %c0_i32_1 = arith.constant 0 : i32
    return %c0_i32, %c0_i32_0 : i32, i32
  }
  func.func @transform_7(%arg0: i32) -> (i32, i32) {
    %c0_i32 = arith.constant 0 : i32
    %c0_i32_0 = arith.constant 0 : i32
    return %arg0, %c0_i32 : i32, i32
  }
}

</mosaic_0001>

<llo_original>
// kernel: neural_net_forward.1
$region0: #{neural_net_forward.1}
  #allocation0 [shape = 'u32[]', space=smem, size = 0x4, offset = 0x4, fixed_abs, tag = 'smem constant byte address 0x4 - core index']
  #allocation1 [shape = 'u32[144,128]{1,0:T(1,128)}', space=vmem, size = 0x12000, scoped, tag = 'internal scratch']
  %s0 = inlined_call_operand.vmem [shape: f32[80,16], index: 0, kind: input, shape index: {}]
  %s1 = inlined_call_operand.vmem [shape: bf16[16,128], index: 1, kind: input, shape index: {}]
  %s2 = inlined_call_operand.vmem [shape: f32[1,128], index: 2, kind: input, shape index: {}]
  %s3 = inlined_call_operand.vmem [shape: bf16[128,128], index: 3, kind: input, shape index: {}]
  %s4 = inlined_call_operand.vmem [shape: f32[1,128], index: 4, kind: input, shape index: {}]
  %s5 = inlined_call_operand.vmem [shape: bf16[128,128], index: 5, kind: input, shape index: {}]
  %s6 = inlined_call_operand.vmem [shape: f32[1,128], index: 6, kind: input, shape index: {}]
  %s7 = inlined_call_operand.vmem [shape: bf16[80,128], index: 7, kind: output, shape index: {}]
  %s8 = sld [smem:[#allocation0]]
  $region38: #{neural_net_forward.1} parent=0
    _
  %s10 = ssub.s32 1, %s8
  %s11 = scalar_select 0, %s10, %s8
  // Predicated region
  $region2: #{neural_net_forward.1} parent=0 // pred_check
    _
  $region3: #{neural_net_forward.1} parent=0 // pred_check_branch
    %13 = sbr.rel (0) target = $region5
  $region4: #{neural_net_forward.1} parent=0 // pred_region
    _
  $region5: #{neural_net_forward.1} parent=0 // pred_fallthru
    _
  // Predicated region
  $region6: #{neural_net_forward.1} parent=0 // pred_check
    _
  $region7: #{neural_net_forward.1} parent=0 // pred_check_branch
    %15 = sbr.rel (0) target = $region9
  $region8: #{neural_net_forward.1} parent=0 // pred_region
    _
  $region9: #{neural_net_forward.1} parent=0 // pred_fallthru
    _
  // Predicated region
  $region10: #{neural_net_forward.1} parent=0 // pred_check
    _
  $region11: #{neural_net_forward.1} parent=0 // pred_check_branch
    %17 = sbr.rel (0) target = $region13
  $region12: #{neural_net_forward.1} parent=0 // pred_region
    _
  $region13: #{neural_net_forward.1} parent=0 // pred_fallthru
    _
  // Predicated region
  $region14: #{neural_net_forward.1} parent=0 // pred_check
    _
  $region15: #{neural_net_forward.1} parent=0 // pred_check_branch
    %19 = sbr.rel (0) target = $region17
  $region16: #{neural_net_forward.1} parent=0 // pred_region
    _
  $region17: #{neural_net_forward.1} parent=0 // pred_fallthru
    _
  // Predicated region
  $region18: #{neural_net_forward.1} parent=0 // pred_check
    _
  $region19: #{neural_net_forward.1} parent=0 // pred_check_branch
    %21 = sbr.rel (0) target = $region21
  $region20: #{neural_net_forward.1} parent=0 // pred_region
    _
  $region21: #{neural_net_forward.1} parent=0 // pred_fallthru
    _
  // Predicated region
  $region22: #{neural_net_forward.1} parent=0 // pred_check
    _
  $region23: #{neural_net_forward.1} parent=0 // pred_check_branch
    %23 = sbr.rel (0) target = $region25
  $region24: #{neural_net_forward.1} parent=0 // pred_region
    _
  $region25: #{neural_net_forward.1} parent=0 // pred_fallthru
    _
  // Predicated region
  $region26: #{neural_net_forward.1} parent=0 // pred_check
    _
  $region27: #{neural_net_forward.1} parent=0 // pred_check_branch
    %25 = sbr.rel (0) target = $region29
  $region28: #{neural_net_forward.1} parent=0 // pred_region
    _
  $region29: #{neural_net_forward.1} parent=0 // pred_fallthru
    _
  %v27 = vld [vmem:[%s0] sm:$0xff]
  %v28 = vld [vmem:[%s0 + $0x8] sm:$0xff]
  %v29 = vld [vmem:[%s0 + $0x10] sm:$0xff]
  %v30 = vld [vmem:[%s0 + $0x18] sm:$0xff]
  %v31 = vld [vmem:[%s0 + $0x20] sm:$0xff]
  %v32 = vld [vmem:[%s0 + $0x28] sm:$0xff]
  %v33 = vld [vmem:[%s0 + $0x30] sm:$0xff]
  %v34 = vld [vmem:[%s0 + $0x38] sm:$0xff]
  %v35 = vld [vmem:[%s0 + $0x40] sm:$0xff]
  %v36 = vld [vmem:[%s0 + $0x48] sm:$0xff]
  %v37 = vpack.c.bf16 %v28, %v27
  %v38 = vpack.c.bf16 %v30, %v29
  %v39 = vpack.c.bf16 %v32, %v31
  %v40 = vpack.c.bf16 %v34, %v33
  %v41 = vpack.c.bf16 %v36, %v35
  %v42 = vld [vmem:[%s1] sm:$0xf]
  %v43 = vld [vmem:[%s1 + $0x4] sm:$0xf]
  %v44 = vld [vmem:[%s2] sm:$0x1]
  %v46 = vlaneseq
  %v47 = vshrl.u32 %v46, 7
  %v48 = vsub.s32 0, %v47
  %v49 = vrot.slane %v44, %v48
  %v53 = vunpack.c.l.b16 %v42
  %v54 = vunpack.c.l.b16 %v43
  %v55 = vpack.c.b16 %v54, %v53
  %vm57 = vcmask 130048
  %v59 = vsel %vm57, %v37, 0
  %v62 = vsel %vm57, %v38, 0
  %v65 = vsel %vm57, %v39, 0
  %v68 = vsel %vm57, %v40, 0
  %v71 = vsel %vm57, %v41, 0
  %73 = vmatprep.subr.bf16.mxu0 0
  %74 = vmatpush1.bf16.msra.mxu0 0
  %75 = vmatprep.subr.bf16.mxu0 0
  %76 = vmatpush1.bf16.msra.mxu0 0
  %77 = vmatprep.subr.bf16.mxu0 0
  %78 = vmatpush1.bf16.msra.mxu0 0
  %79 = vmatprep.subr.bf16.mxu0 0
  %80 = vmatpush1.bf16.msra.mxu0 0
  %81 = vmatprep.subr.bf16.mxu0 0
  %82 = vmatpush1.bf16.msra.mxu0 0
  %83 = vmatprep.subr.bf16.mxu0 0
  %84 = vmatpush1.bf16.msra.mxu0 0
  %85 = vmatprep.subr.bf16.mxu0 0
  %86 = vmatpush1.bf16.msra.mxu0 0
  %87 = vmatprep.subr.bf16.mxu0 0
  %88 = vmatpush1.bf16.msra.mxu0 %v55
  %89 = vmatprep.subr.bf16.mxu0 0
  %90 = vmatpush2.bf16.msra.mxu0 0
  %91 = vmatprep.subr.bf16.mxu0 0
  %92 = vmatpush2.bf16.msra.mxu0 0
  %93 = vmatprep.subr.bf16.mxu0 0
  %94 = vmatpush2.bf16.msra.mxu0 0
  %95 = vmatprep.subr.bf16.mxu0 0
  %96 = vmatpush2.bf16.msra.mxu0 0
  %97 = vmatprep.subr.bf16.mxu0 0
  %98 = vmatpush2.bf16.msra.mxu0 0
  %99 = vmatprep.subr.bf16.mxu0 0
  %100 = vmatpush2.bf16.msra.mxu0 0
  %101 = vmatprep.subr.bf16.mxu0 0
  %102 = vmatpush2.bf16.msra.mxu0 0
  %103 = vmatprep.subr.bf16.mxu0 0
  %104 = vmatpush2.bf16.msra.mxu0 0
  %105 = vmatprep.mubr.bf16.mxu0 0
  %106 = vmatmul.mubr.bf16.gmra.mxu0 %v59
  %v107 = vpop.f32.mrf.mxu0
  %v108 = vadd.f32 %v49, %v107
  %v109 = vpop.f32.mrf.mxu0
  %v110 = vpop.f32.mrf.mxu0
  %v111 = vadd.f32 %v49, %v110
  %v112 = vpop.f32.mrf.mxu0
  %113 = vmatprep.mubr.bf16.mxu0 0
  %114 = vmatmul.mubr.bf16.gmra.mxu0 %v62
  %v115 = vpop.f32.mrf.mxu0
  %v116 = vadd.f32 %v49, %v115
  %v117 = vpop.f32.mrf.mxu0
  %v118 = vpop.f32.mrf.mxu0
  %v119 = vadd.f32 %v49, %v118
  %v120 = vpop.f32.mrf.mxu0
  %121 = vmatprep.mubr.bf16.mxu0 0
  %122 = vmatmul.mubr.bf16.gmra.mxu0 %v65
  %v123 = vpop.f32.mrf.mxu0
  %v124 = vadd.f32 %v49, %v123
  %v125 = vpop.f32.mrf.mxu0
  %v126 = vpop.f32.mrf.mxu0
  %v127 = vadd.f32 %v49, %v126
  %v128 = vpop.f32.mrf.mxu0
  %129 = vmatprep.mubr.bf16.mxu0 0
  %130 = vmatmul.mubr.bf16.gmra.mxu0 %v68
  %v131 = vpop.f32.mrf.mxu0
  %v132 = vadd.f32 %v49, %v131
  %v133 = vpop.f32.mrf.mxu0
  %v134 = vpop.f32.mrf.mxu0
  %v135 = vadd.f32 %v49, %v134
  %v136 = vpop.f32.mrf.mxu0
  %137 = vmatprep.mubr.bf16.mxu0 0
  %138 = vmatmul.mubr.bf16.gmra.mxu0 %v71
  %v139 = vpop.f32.mrf.mxu0
  %v140 = vadd.f32 %v49, %v139
  %v141 = vpop.f32.mrf.mxu0
  %v142 = vpop.f32.mrf.mxu0
  %v143 = vadd.f32 %v49, %v142
  %v144 = vpop.f32.mrf.mxu0
  %145 = vdwg.mxu0
  %v146 = vmax.f32 %v108, 0.0
  %v147 = vmax.f32 %v111, 0.0
  %v148 = vmax.f32 %v116, 0.0
  %v149 = vmax.f32 %v119, 0.0
  %v150 = vmax.f32 %v124, 0.0
  %v151 = vmax.f32 %v127, 0.0
  %v152 = vmax.f32 %v132, 0.0
  %v153 = vmax.f32 %v135, 0.0
  %v154 = vmax.f32 %v140, 0.0
  %v155 = vmax.f32 %v143, 0.0
  %v156 = vpack.c.bf16 %v147, %v146
  %v157 = vpack.c.bf16 %v149, %v148
  %v158 = vpack.c.bf16 %v151, %v150
  %v159 = vpack.c.bf16 %v153, %v152
  %v160 = vpack.c.bf16 %v155, %v154
  %v161 = vld [vmem:[%s3] sm:$0xf]
  %v162 = vld [vmem:[%s3 + $0x4] sm:$0xf]
  %v163 = vld [vmem:[%s3 + $0x8] sm:$0xf]
  %v164 = vld [vmem:[%s3 + $0xc] sm:$0xf]
  %v165 = vld [vmem:[%s3 + $0x10] sm:$0xf]
  %v166 = vld [vmem:[%s3 + $0x14] sm:$0xf]
  %v167 = vld [vmem:[%s3 + $0x18] sm:$0xf]
  %v168 = vld [vmem:[%s3 + $0x1c] sm:$0xf]
  %v169 = vld [vmem:[%s3 + $0x20] sm:$0xf]
  %v170 = vld [vmem:[%s3 + $0x24] sm:$0xf]
  %v171 = vld [vmem:[%s3 + $0x28] sm:$0xf]
  %v172 = vld [vmem:[%s3 + $0x2c] sm:$0xf]
  %v173 = vld [vmem:[%s3 + $0x30] sm:$0xf]
  %v174 = vld [vmem:[%s3 + $0x34] sm:$0xf]
  %v175 = vld [vmem:[%s3 + $0x38] sm:$0xf]
  %v176 = vld [vmem:[%s3 + $0x3c] sm:$0xf]
  %v177 = vld [vmem:[%s4] sm:$0x1]
  %v179 = vlaneseq
  %v180 = vshrl.u32 %v179, 7
  %v181 = vsub.s32 0, %v180
  %v182 = vrot.slane %v177, %v181
  %v200 = vunpack.c.l.b16 %v161
  %v201 = vunpack.c.l.b16 %v162
  %v202 = vunpack.c.l.b16 %v163
  %v203 = vunpack.c.l.b16 %v164
  %v204 = vunpack.c.l.b16 %v165
  %v205 = vunpack.c.l.b16 %v166
  %v206 = vunpack.c.l.b16 %v167
  %v207 = vunpack.c.l.b16 %v168
  %v208 = vunpack.c.l.b16 %v169
  %v209 = vunpack.c.l.b16 %v170
  %v210 = vunpack.c.l.b16 %v171
  %v211 = vunpack.c.l.b16 %v172
  %v212 = vunpack.c.l.b16 %v173
  %v213 = vunpack.c.l.b16 %v174
  %v214 = vunpack.c.l.b16 %v175
  %v215 = vunpack.c.l.b16 %v176
  %v216 = vpack.c.b16 %v201, %v200
  %v217 = vpack.c.b16 %v203, %v202
  %v218 = vpack.c.b16 %v205, %v204
  %v219 = vpack.c.b16 %v207, %v206
  %v220 = vpack.c.b16 %v209, %v208
  %v221 = vpack.c.b16 %v211, %v210
  %v222 = vpack.c.b16 %v213, %v212
  %v223 = vpack.c.b16 %v215, %v214
  %232 = vmatprep.subr.bf16.mxu0 0
  %233 = vmatpush1.bf16.msra.mxu0 %v223
  %234 = vmatprep.subr.bf16.mxu0 0
  %235 = vmatpush1.bf16.msra.mxu0 %v222
  %236 = vmatprep.subr.bf16.mxu0 0
  %237 = vmatpush1.bf16.msra.mxu0 %v221
  %238 = vmatprep.subr.bf16.mxu0 0
  %239 = vmatpush1.bf16.msra.mxu0 %v220
  %240 = vmatprep.subr.bf16.mxu0 0
  %241 = vmatpush1.bf16.msra.mxu0 %v219
  %242 = vmatprep.subr.bf16.mxu0 0
  %243 = vmatpush1.bf16.msra.mxu0 %v218
  %244 = vmatprep.subr.bf16.mxu0 0
  %245 = vmatpush1.bf16.msra.mxu0 %v217
  %246 = vmatprep.subr.bf16.mxu0 0
  %247 = vmatpush1.bf16.msra.mxu0 %v216
  %248 = vmatprep.subr.bf16.mxu0 0
  %249 = vmatpush2.bf16.msra.mxu0 0
  %250 = vmatprep.subr.bf16.mxu0 0
  %251 = vmatpush2.bf16.msra.mxu0 0
  %252 = vmatprep.subr.bf16.mxu0 0
  %253 = vmatpush2.bf16.msra.mxu0 0
  %254 = vmatprep.subr.bf16.mxu0 0
  %255 = vmatpush2.bf16.msra.mxu0 0
  %256 = vmatprep.subr.bf16.mxu0 0
  %257 = vmatpush2.bf16.msra.mxu0 0
  %258 = vmatprep.subr.bf16.mxu0 0
  %259 = vmatpush2.bf16.msra.mxu0 0
  %260 = vmatprep.subr.bf16.mxu0 0
  %261 = vmatpush2.bf16.msra.mxu0 0
  %262 = vmatprep.subr.bf16.mxu0 0
  %263 = vmatpush2.bf16.msra.mxu0 0
  %264 = vmatprep.mubr.bf16.mxu0 0
  %265 = vmatmul.mubr.bf16.gmra.mxu0 %v156
  %v266 = vpop.f32.mrf.mxu0
  %v267 = vadd.f32 %v182, %v266
  %v268 = vpop.f32.mrf.mxu0
  %v269 = vpop.f32.mrf.mxu0
  %v270 = vadd.f32 %v182, %v269
  %v271 = vpop.f32.mrf.mxu0
  %272 = vmatprep.mubr.bf16.mxu0 0
  %273 = vmatmul.mubr.bf16.gmra.mxu0 %v157
  %v274 = vpop.f32.mrf.mxu0
  %v275 = vadd.f32 %v182, %v274
  %v276 = vpop.f32.mrf.mxu0
  %v277 = vpop.f32.mrf.mxu0
  %v278 = vadd.f32 %v182, %v277
  %v279 = vpop.f32.mrf.mxu0
  %280 = vmatprep.mubr.bf16.mxu0 0
  %281 = vmatmul.mubr.bf16.gmra.mxu0 %v158
  %v282 = vpop.f32.mrf.mxu0
  %v283 = vadd.f32 %v182, %v282
  %v284 = vpop.f32.mrf.mxu0
  %v285 = vpop.f32.mrf.mxu0
  %v286 = vadd.f32 %v182, %v285
  %v287 = vpop.f32.mrf.mxu0
  %288 = vmatprep.mubr.bf16.mxu0 0
  %289 = vmatmul.mubr.bf16.gmra.mxu0 %v159
  %v290 = vpop.f32.mrf.mxu0
  %v291 = vadd.f32 %v182, %v290
  %v292 = vpop.f32.mrf.mxu0
  %v293 = vpop.f32.mrf.mxu0
  %v294 = vadd.f32 %v182, %v293
  %v295 = vpop.f32.mrf.mxu0
  %296 = vmatprep.mubr.bf16.mxu0 0
  %297 = vmatmul.mubr.bf16.gmra.mxu0 %v160
  %v298 = vpop.f32.mrf.mxu0
  %v299 = vadd.f32 %v182, %v298
  %v300 = vpop.f32.mrf.mxu0
  %v301 = vpop.f32.mrf.mxu0
  %v302 = vadd.f32 %v182, %v301
  %v303 = vpop.f32.mrf.mxu0
  %304 = vdwg.mxu0
  %v305 = vmax.f32 %v267, 0.0
  %v306 = vmax.f32 %v270, 0.0
  %v307 = vmax.f32 %v275, 0.0
  %v308 = vmax.f32 %v278, 0.0
  %v309 = vmax.f32 %v283, 0.0
  %v310 = vmax.f32 %v286, 0.0
  %v311 = vmax.f32 %v291, 0.0
  %v312 = vmax.f32 %v294, 0.0
  %v313 = vmax.f32 %v299, 0.0
  %v314 = vmax.f32 %v302, 0.0
  %v315 = vpack.c.bf16 %v306, %v305
  %v316 = vpack.c.bf16 %v308, %v307
  %v317 = vpack.c.bf16 %v310, %v309
  %v318 = vpack.c.bf16 %v312, %v311
  %v319 = vpack.c.bf16 %v314, %v313
  %v320 = vld [vmem:[%s5] sm:$0xf]
  %v321 = vld [vmem:[%s5 + $0x4] sm:$0xf]
  %v322 = vld [vmem:[%s5 + $0x8] sm:$0xf]
  %v323 = vld [vmem:[%s5 + $0xc] sm:$0xf]
  %v324 = vld [vmem:[%s5 + $0x10] sm:$0xf]
  %v325 = vld [vmem:[%s5 + $0x14] sm:$0xf]
  %v326 = vld [vmem:[%s5 + $0x18] sm:$0xf]
  %v327 = vld [vmem:[%s5 + $0x1c] sm:$0xf]
  %v328 = vld [vmem:[%s5 + $0x20] sm:$0xf]
  %v329 = vld [vmem:[%s5 + $0x24] sm:$0xf]
  %v330 = vld [vmem:[%s5 + $0x28] sm:$0xf]
  %v331 = vld [vmem:[%s5 + $0x2c] sm:$0xf]
  %v332 = vld [vmem:[%s5 + $0x30] sm:$0xf]
  %v333 = vld [vmem:[%s5 + $0x34] sm:$0xf]
  %v334 = vld [vmem:[%s5 + $0x38] sm:$0xf]
  %v335 = vld [vmem:[%s5 + $0x3c] sm:$0xf]
  %v336 = vld [vmem:[%s6] sm:$0x1]
  %v338 = vlaneseq
  %v339 = vshrl.u32 %v338, 7
  %v340 = vsub.s32 0, %v339
  %v341 = vrot.slane %v336, %v340
  %v359 = vunpack.c.l.b16 %v320
  %v360 = vunpack.c.l.b16 %v321
  %v361 = vunpack.c.l.b16 %v322
  %v362 = vunpack.c.l.b16 %v323
  %v363 = vunpack.c.l.b16 %v324
  %v364 = vunpack.c.l.b16 %v325
  %v365 = vunpack.c.l.b16 %v326
  %v366 = vunpack.c.l.b16 %v327
  %v367 = vunpack.c.l.b16 %v328
  %v368 = vunpack.c.l.b16 %v329
  %v369 = vunpack.c.l.b16 %v330
  %v370 = vunpack.c.l.b16 %v331
  %v371 = vunpack.c.l.b16 %v332
  %v372 = vunpack.c.l.b16 %v333
  %v373 = vunpack.c.l.b16 %v334
  %v374 = vunpack.c.l.b16 %v335
  %v375 = vpack.c.b16 %v360, %v359
  %v376 = vpack.c.b16 %v362, %v361
  %v377 = vpack.c.b16 %v364, %v363
  %v378 = vpack.c.b16 %v366, %v365
  %v379 = vpack.c.b16 %v368, %v367
  %v380 = vpack.c.b16 %v370, %v369
  %v381 = vpack.c.b16 %v372, %v371
  %v382 = vpack.c.b16 %v374, %v373
  %391 = vmatprep.subr.bf16.mxu0 0
  %392 = vmatpush1.bf16.msra.mxu0 %v382
  %393 = vmatprep.subr.bf16.mxu0 0
  %394 = vmatpush1.bf16.msra.mxu0 %v381
  %395 = vmatprep.subr.bf16.mxu0 0
  %396 = vmatpush1.bf16.msra.mxu0 %v380
  %397 = vmatprep.subr.bf16.mxu0 0
  %398 = vmatpush1.bf16.msra.mxu0 %v379
  %399 = vmatprep.subr.bf16.mxu0 0
  %400 = vmatpush1.bf16.msra.mxu0 %v378
  %401 = vmatprep.subr.bf16.mxu0 0
  %402 = vmatpush1.bf16.msra.mxu0 %v377
  %403 = vmatprep.subr.bf16.mxu0 0
  %404 = vmatpush1.bf16.msra.mxu0 %v376
  %405 = vmatprep.subr.bf16.mxu0 0
  %406 = vmatpush1.bf16.msra.mxu0 %v375
  %407 = vmatprep.subr.bf16.mxu0 0
  %408 = vmatpush2.bf16.msra.mxu0 0
  %409 = vmatprep.subr.bf16.mxu0 0
  %410 = vmatpush2.bf16.msra.mxu0 0
  %411 = vmatprep.subr.bf16.mxu0 0
  %412 = vmatpush2.bf16.msra.mxu0 0
  %413 = vmatprep.subr.bf16.mxu0 0
  %414 = vmatpush2.bf16.msra.mxu0 0
  %415 = vmatprep.subr.bf16.mxu0 0
  %416 = vmatpush2.bf16.msra.mxu0 0
  %417 = vmatprep.subr.bf16.mxu0 0
  %418 = vmatpush2.bf16.msra.mxu0 0
  %419 = vmatprep.subr.bf16.mxu0 0
  %420 = vmatpush2.bf16.msra.mxu0 0
  %421 = vmatprep.subr.bf16.mxu0 0
  %422 = vmatpush2.bf16.msra.mxu0 0
  %423 = vmatprep.mubr.bf16.mxu0 0
  %424 = vmatmul.mubr.bf16.gmra.mxu0 %v315
  %v425 = vpop.f32.mrf.mxu0
  %v426 = vadd.f32 %v341, %v425
  %v427 = vpop.f32.mrf.mxu0
  %v428 = vpop.f32.mrf.mxu0
  %v429 = vadd.f32 %v341, %v428
  %v430 = vpop.f32.mrf.mxu0
  %431 = vmatprep.mubr.bf16.mxu0 0
  %432 = vmatmul.mubr.bf16.gmra.mxu0 %v316
  %v433 = vpop.f32.mrf.mxu0
  %v434 = vadd.f32 %v341, %v433
  %v435 = vpop.f32.mrf.mxu0
  %v436 = vpop.f32.mrf.mxu0
  %v437 = vadd.f32 %v341, %v436
  %v438 = vpop.f32.mrf.mxu0
  %439 = vmatprep.mubr.bf16.mxu0 0
  %440 = vmatmul.mubr.bf16.gmra.mxu0 %v317
  %v441 = vpop.f32.mrf.mxu0
  %v442 = vadd.f32 %v341, %v441
  %v443 = vpop.f32.mrf.mxu0
  %v444 = vpop.f32.mrf.mxu0
  %v445 = vadd.f32 %v341, %v444
  %v446 = vpop.f32.mrf.mxu0
  %447 = vmatprep.mubr.bf16.mxu0 0
  %448 = vmatmul.mubr.bf16.gmra.mxu0 %v318
  %v449 = vpop.f32.mrf.mxu0
  %v450 = vadd.f32 %v341, %v449
  %v451 = vpop.f32.mrf.mxu0
  %v452 = vpop.f32.mrf.mxu0
  %v453 = vadd.f32 %v341, %v452
  %v454 = vpop.f32.mrf.mxu0
  %455 = vmatprep.mubr.bf16.mxu0 0
  %456 = vmatmul.mubr.bf16.gmra.mxu0 %v319
  %v457 = vpop.f32.mrf.mxu0
  %v458 = vadd.f32 %v341, %v457
  %v459 = vpop.f32.mrf.mxu0
  %v460 = vpop.f32.mrf.mxu0
  %v461 = vadd.f32 %v341, %v460
  %v462 = vpop.f32.mrf.mxu0
  %463 = vdwg.mxu0
  %v464 = vpack.c.bf16 %v429, %v426
  %v465 = vpack.c.bf16 %v437, %v434
  %v466 = vpack.c.bf16 %v445, %v442
  %v467 = vpack.c.bf16 %v453, %v450
  %v468 = vpack.c.bf16 %v461, %v458
  %v474 = vunpack.c.l.b16 %v464
  %v475 = vunpack.c.h.b16 %v464
  %v476 = vunpack.c.l.b16 %v465
  %v477 = vunpack.c.h.b16 %v465
  %v478 = vunpack.c.l.b16 %v466
  %v479 = vunpack.c.h.b16 %v466
  %v480 = vunpack.c.l.b16 %v467
  %v481 = vunpack.c.h.b16 %v467
  %v482 = vunpack.c.l.b16 %v468
  %v483 = vunpack.c.h.b16 %v468
  %v484 = vpack.c.b16 %v474, %v474
  %v485 = vpack.c.b16 %v475, %v475
  %v486 = vpack.c.b16 %v476, %v476
  %v487 = vpack.c.b16 %v477, %v477
  %v488 = vpack.c.b16 %v478, %v478
  %v489 = vpack.c.b16 %v479, %v479
  %v490 = vpack.c.b16 %v480, %v480
  %v491 = vpack.c.b16 %v481, %v481
  %v492 = vpack.c.b16 %v482, %v482
  %v493 = vpack.c.b16 %v483, %v483
  %504 = vst [vmem:[%s7] sm:$0xf] %v484
  %505 = vst [vmem:[%s7 + $0x4] sm:$0xf] %v485
  %506 = vst [vmem:[%s7 + $0x8] sm:$0xf] %v486
  %507 = vst [vmem:[%s7 + $0xc] sm:$0xf] %v487
  %508 = vst [vmem:[%s7 + $0x10] sm:$0xf] %v488
  %509 = vst [vmem:[%s7 + $0x14] sm:$0xf] %v489
  %510 = vst [vmem:[%s7 + $0x18] sm:$0xf] %v490
  %511 = vst [vmem:[%s7 + $0x1c] sm:$0xf] %v491
  %512 = vst [vmem:[%s7 + $0x20] sm:$0xf] %v492
  %513 = vst [vmem:[%s7 + $0x24] sm:$0xf] %v493
  // Predicated region
  $region30: #{neural_net_forward.1} parent=0 // pred_check
    _
  $region31: #{neural_net_forward.1} parent=0 // pred_check_branch
    %515 = sbr.rel (0) target = $region33
  $region32: #{neural_net_forward.1} parent=0 // pred_region
    _
  $region33: #{neural_net_forward.1} parent=0 // pred_fallthru
    _
  // Predicated region
  $region34: #{neural_net_forward.1} parent=0 // pred_check
    _
  $region35: #{neural_net_forward.1} parent=0 // pred_check_branch
    %517 = sbr.rel (0) target = $region37
  $region36: #{neural_net_forward.1} parent=0 // pred_region
    _
  $region37: #{neural_net_forward.1} parent=0 // pred_fallthru
    _

</llo_original>
